<compile_context>
chip_gen: v6e
topology: v6e:2x2x1
jax: 0.10.0
libtpu: 0.0.40
codegen_flags: <defaults>
</compile_context>

<pallas_src>
import jax
import jax.numpy as jnp
from jax.experimental import pallas as pl
from jax.experimental.pallas import tpu as pltpu


def _round_up(x: int, m: int) -> int:
    return ((x + m - 1) // m) * m


# ----------------------------------------------------------------------------
# Kernel body: (M, N, K)-tiled matmul with bias folded into the k==0 init and
# optional LeakyReLU fused into the k==last writeback.  f32 accumulator.
# ----------------------------------------------------------------------------
def _make_mlp_kernel(alpha: float, apply_leakyrelu: bool):
    use_max_trick = 0.0 <= alpha <= 1.0  # max(y, a*y) == LeakyReLU only then

    def mlp_kernel(x_ref, w_ref, b_ref, o_ref, acc_ref):
        # x_ref: (tm, tk)   w_ref: (tk, tn)  [(n_in, n_out) layout]
        # b_ref: (1, tn) f32   o_ref: (tm, tn)   acc_ref: (tm, tn) f32
        k = pl.program_id(2)

        @pl.when(k == 0)
        def _init():
            # Fold the bias into the accumulator init (one VPU pass per tile).
            acc_ref[...] = jnp.broadcast_to(
                b_ref[...].astype(jnp.float32), acc_ref.shape)

        acc_ref[...] += jnp.dot(x_ref[...], w_ref[...],
                                preferred_element_type=jnp.float32)

        @pl.when(k == pl.num_programs(2) - 1)
        def _finalize():
            y = acc_ref[...]
            if apply_leakyrelu:
                if use_max_trick:
                    y = jnp.maximum(y, alpha * y)     # single vmax per vreg
                else:
                    y = jnp.where(y > 0, y, alpha * y)
            o_ref[...] = y.astype(o_ref.dtype)

    return mlp_kernel


# ----------------------------------------------------------------------------
# Tile / VMEM selection (generation-aware).
# ----------------------------------------------------------------------------
def _vmem_limits():
    """Return (vmem_limit_bytes, tile_budget_bytes) for this generation."""
    try:
        cap = int(pltpu.get_tpu_info().vmem_capacity_bytes)
    except Exception:
        cap = 64 * 1024 * 1024                      # conservative fallback
    if cap >= 96 * 1024 * 1024:                     # v5e / v6e: 128 MiB VMEM
        limit = 96 * 1024 * 1024
    else:                                           # v7x: 64 MiB physical
        limit = min(44 * 1024 * 1024, (cap * 11) // 16)
    return limit, int(limit * 0.7)                  # headroom for compiler


def _tile_vmem_bytes(tm, tn, tk, op_sz, out_sz):
    return (2 * tm * tk * op_sz        # x tile, double-buffered
            + 2 * tk * tn * op_sz      # weight tile, double-buffered
            + 2 * tn * 4               # bias tile
            + 2 * tm * tn * out_sz     # output tile, double-buffered
            + tm * tn * 4)             # f32 accumulator scratch


def _choose_nk_tiles(n_in: int, n_out: int, *, split_n: bool):
    """Pick (tn, tk): lane-dense, MXU-friendly, low-padding tiles."""
    np0 = _round_up(n_out, 128)
    kp0 = _round_up(n_in, 128)

    # N tile: whole (padded) N when small; otherwise a multiple of 256
    # (full 2x256^2 MXU width on v6e/v7x, still a 128-multiple for v5e).
    if np0 <= 512:
        tn = np0
    elif np0 % 512 == 0:
        tn = 512
    else:
        tn = 256
    # Megacore: guarantee >= 2 parallel grid steps along N when requested
    # (small-batch inference where the M grid collapses to a single step).
    if split_n and (np0 // tn) <= 1 and np0 >= 256:
        tn = _round_up((np0 + 1) // 2, 128)

    # K tile: whole (padded) K when it fits; otherwise a large 256-multiple.
    if kp0 <= 1024:
        tk = kp0
    elif kp0 % 1024 == 0:
        tk = 1024
    elif kp0 % 512 == 0:
        tk = 512
    else:
        tk = 256
    return tn, tk


# ----------------------------------------------------------------------------
# One-time (amortizable) preparation of the static nn.Linear parameters.
# ----------------------------------------------------------------------------
def prepare_mlp_params(weight, bias, *, compute_dtype=jnp.bfloat16,
                       assume_small_batch=True):
    """Transpose -> (n_in, n_out), cast to compute_dtype, pad to tile multiples.

    Do this ONCE for a deployed model and pass the result to mlp_forward via
    `prepared=` so no per-call weight/bias HBM passes remain.
    """
    n_out, n_in = weight.shape
    tn, tk = _choose_nk_tiles(n_in, n_out, split_n=assume_small_batch)
    kp, np_ = _round_up(n_in, tk), _round_up(n_out, tn)

    w_t = jnp.swapaxes(weight, 0, 1)                       # (n_in, n_out)
    if compute_dtype is not None and w_t.dtype != jnp.dtype(compute_dtype):
        w_t = w_t.astype(compute_dtype)
    if (kp, np_) != (n_in, n_out):
        w_t = jnp.pad(w_t, ((0, kp - n_in), (0, np_ - n_out)))

    b = bias.astype(jnp.float32)
    if np_ != n_out:
        b = jnp.pad(b, (0, np_ - n_out))
    b = b.reshape(1, np_)

    return dict(w_t=w_t, b=b, n_in=n_in, n_out=n_out, tn=tn, tk=tk,
                compute_dtype=jnp.dtype(w_t.dtype))


# ----------------------------------------------------------------------------
# Forward wrapper (Pallas equivalent of MLP.forward, inference mode).
# ----------------------------------------------------------------------------
def mlp_forward(x, weight=None, bias=None, *, alpha, activation=None,
                compute_dtype=jnp.bfloat16, out_dtype=None, prepared=None):
    """y = LeakyReLU_alpha(x @ weight.T + bias)   (LeakyReLU skipped if
    `activation` is truthy, mirroring the PyTorch module's inverted flag).

    x:        (B, n_in)
    weight:   (n_out, n_in)  native nn.Linear layout (ignored if prepared=)
    bias:     (n_out,)
    compute_dtype: MXU operand dtype (default bf16; None => keep x.dtype).
                   Accumulation, bias and LeakyReLU are always f32.
    out_dtype: output dtype (default: x's original dtype).
    prepared:  result of prepare_mlp_params() to skip per-call weight work.
    """
    B, n_in_x = x.shape
    out_dtype = x.dtype if out_dtype is None else jnp.dtype(out_dtype)
    apply_leakyrelu = not activation   # PyTorch: `if activation: x = x`

    if prepared is not None:
        w_t, b_p = prepared["w_t"], prepared["b"]
        n_in, n_out = prepared["n_in"], prepared["n_out"]
        tn, tk = prepared["tn"], prepared["tk"]
        operand_dtype = jnp.dtype(prepared["compute_dtype"])
        Kp, Np = w_t.shape
        assert n_in == n_in_x
    else:
        n_out, n_in = weight.shape
        assert n_in == n_in_x
        operand_dtype = jnp.dtype(x.dtype if compute_dtype is None
                                  else compute_dtype)

    sublane = 16 if operand_dtype == jnp.dtype(jnp.bfloat16) else 8
    op_sz = operand_dtype.itemsize
    out_sz = out_dtype.itemsize

    # ---- M tile: as large as possible (weight is re-fetched Mp/tm times). --
    tm = min(_round_up(B, sublane), 1024)
    Mp = _round_up(B, tm)
    grid_m = Mp // tm

    if prepared is None:
        tn, tk = _choose_nk_tiles(n_in, n_out, split_n=(grid_m == 1))
        Kp, Np = _round_up(n_in, tk), _round_up(n_out, tn)
        # One pass over the static weight: transpose + cast + pad (guarded).
        w_t = jnp.swapaxes(weight, 0, 1)
        if w_t.dtype != operand_dtype:
            w_t = w_t.astype(operand_dtype)
        if (Kp, Np) != (n_in, n_out):
            w_t = jnp.pad(w_t, ((0, Kp - n_in), (0, Np - n_out)))
        b_p = bias.astype(jnp.float32)
        if Np != n_out:
            b_p = jnp.pad(b_p, (0, Np - n_out))
        b_p = b_p.reshape(1, Np)

    # ---- VMEM budget (generation-aware); shrink tm only if needed. --------
    vmem_limit, budget = _vmem_limits()
    while _tile_vmem_bytes(tm, tn, tk, op_sz, out_sz) > budget and tm > sublane:
        tm = _round_up(max(sublane, tm // 2), sublane)
    Mp = _round_up(B, tm)

    # ---- x: cast + pad, both guarded. --------------------------------------
    if x.dtype != operand_dtype:
        x = x.astype(operand_dtype)
    if (Mp, Kp) != (B, n_in):
        x = jnp.pad(x, ((0, Mp - B), (0, Kp - n_in)))

    grid = (Mp // tm, Np // tn, Kp // tk)
    kernel = _make_mlp_kernel(float(alpha), apply_leakyrelu)

    cost = pl.CostEstimate(
        flops=2 * B * n_in * n_out,
        transcendentals=0,
        bytes_accessed=(x.size * op_sz + w_t.size * op_sz
                        + b_p.size * 4 + Mp * Np * out_sz),
    )

    out_p = pl.pallas_call(
        kernel,
        out_shape=jax.ShapeDtypeStruct((Mp, Np), out_dtype),
        grid_spec=pltpu.PrefetchScalarGridSpec(
            num_scalar_prefetch=0,
            grid=grid,
            in_specs=[
                pl.BlockSpec((tm, tk), lambda i, j, k: (i, k)),   # x tile
                pl.BlockSpec((tk, tn), lambda i, j, k: (k, j)),   # w_t tile
                pl.BlockSpec((1, tn), lambda i, j, k: (0, j)),    # bias tile
            ],
            out_specs=pl.BlockSpec((tm, tn), lambda i, j, k: (i, j)),
            scratch_shapes=[pltpu.VMEM((tm, tn), jnp.float32)],
        ),
        compiler_params=pltpu.CompilerParams(
            dimension_semantics=("parallel", "parallel", "arbitrary"),
            vmem_limit_bytes=vmem_limit,
        ),
        cost_estimate=cost,
    )(x, w_t, b_p)

    if (Mp, Np) != (B, n_out):
        out_p = out_p[:B, :n_out]
    return out_p


# ----------------------------------------------------------------------------
# Reference + self-test.
# ----------------------------------------------------------------------------
def _ref_mlp(x, weight, bias, alpha, activation):
    y = x @ weight.T + bias
    if not activation:
        y = jnp.where(y > 0, y, alpha * y)
    return y


if __name__ == "__main__":
    key = jax.random.PRNGKey(0)
    ks = jax.random.split(key, 6)

    alpha, dropout = 0.2, 0.5          # dropout is identity at inference

    # ---- Small shape consistent with the module (B=8, n_in=32, n_out=64) --
    B, n_in, n_out = 8, 32, 64
    x = jax.random.normal(ks[0], (B, n_in), dtype=jnp.float32)
    bound = 1.0 / float(n_in) ** 0.5
    weight = jax.random.uniform(ks[1], (n_out, n_in), jnp.float32, -bound, bound)
    bias = jax.random.uniform(ks[2], (n_out,), jnp.float32, -bound, bound)
    ref = _ref_mlp(x, weight, bias, alpha, None)

    # f32 compute path (tight check), LeakyReLU applied (activation=None).
    out_f32 = jax.block_until_ready(
        mlp_forward(x, weight, bias, alpha=alpha, activation=None,
                    compute_dtype=None))
    assert out_f32.shape == (B, n_out) and out_f32.dtype == x.dtype
    assert jnp.allclose(out_f32, ref, atol=1e-5, rtol=1e-5)

    # Default bf16 compute path (f32 accumulation) -- looser tolerance.
    out_bf16 = jax.block_until_ready(
        mlp_forward(x, weight, bias, alpha=alpha, activation=None))
    assert jnp.allclose(out_bf16, ref, atol=2e-2, rtol=2e-2)

    # activation=True branch -> LeakyReLU skipped (mirrors `x = x`).
    out_id = jax.block_until_ready(
        mlp_forward(x, weight, bias, alpha=alpha, activation=True,
                    compute_dtype=None))
    assert jnp.allclose(out_id, _ref_mlp(x, weight, bias, alpha, True),
                        atol=1e-5, rtol=1e-5)

    # ---- Larger shape exercising tiling + the megacore N split ------------
    B3, n_in3, n_out3 = 256, 384, 320
    x3 = jax.random.normal(ks[3], (B3, n_in3), dtype=jnp.float32)
    bound3 = 1.0 / float(n_in3) ** 0.5
    w3 = jax.random.uniform(ks[4], (n_out3, n_in3), jnp.float32, -bound3, bound3)
    b3 = jax.random.uniform(ks[5], (n_out3,), jnp.float32, -bound3, bound3)
    ref3 = _ref_mlp(x3, w3, b3, alpha, None)

    out3_f32 = jax.block_until_ready(
        mlp_forward(x3, w3, b3, alpha=alpha, activation=None,
                    compute_dtype=None))
    assert jnp.allclose(out3_f32, ref3, atol=1e-4, rtol=1e-4)

    out3_bf16 = jax.block_until_ready(
        mlp_forward(x3, w3, b3, alpha=alpha, activation=None))
    assert jnp.allclose(out3_bf16, ref3, atol=3e-2, rtol=3e-2)

    # Amortized-weight inference path: transform the static params ONCE.
    prep = prepare_mlp_params(w3, b3)          # bf16 by default
    out3_prep = jax.block_until_ready(
        mlp_forward(x3, alpha=alpha, activation=None, prepared=prep))
    assert jnp.allclose(out3_prep, ref3, atol=3e-2, rtol=3e-2)

    print("KERNEL_OK")
</pallas_src>

<mosaic_0001>
module attributes {stable_mosaic.version = 11 : i64} {
  func.func @mlp_kernel(%arg0: i32, %arg1: i32, %arg2: i32, %arg3: memref<8x128xf32, #tpu.memory_space<vmem>>, %arg4: memref<128x128xf32, #tpu.memory_space<vmem>>, %arg5: memref<1x128xf32, #tpu.memory_space<vmem>>, %arg6: memref<8x128xf32, #tpu.memory_space<vmem>>, %arg7: memref<8x128xf32, #tpu.memory_space<vmem>>) attributes {dimension_semantics = [#tpu.dimension_semantics<parallel>, #tpu.dimension_semantics<parallel>, #tpu.dimension_semantics<arbitrary>], iteration_bounds = array<i64: 1, 1, 1>, scalar_prefetch = 0 : i64, scratch_operands = 1 : i64, tpu.core_type = #tpu.core_type<tc>, window_params = [{transform_indices = @transform_0, window_bounds = array<i64: 8, 128>}, {transform_indices = @transform_1, window_bounds = array<i64: 128, 128>}, {transform_indices = @transform_2, window_bounds = array<i64: 1, 128>}, {transform_indices = @transform_3, window_bounds = array<i64: 8, 128>}]} {
    %c0_i32 = arith.constant 0 : i32
    %0 = arith.cmpi eq, %arg2, %c0_i32 : i32
    %1 = arith.extui %0 : i1 to i32
    %c0_i32_0 = arith.constant 0 : i32
    %2 = arith.cmpi ne, %1, %c0_i32_0 : i32
    scf.if %2 {
      %c0_10 = arith.constant 0 : index
      %c0_11 = arith.constant 0 : index
      %12 = vector.load %arg5[%c0_10, %c0_11] : memref<1x128xf32, #tpu.memory_space<vmem>>, vector<1x128xf32>
      %13 = vector.shape_cast %12 : vector<1x128xf32> to vector<1x128xf32>
      %14 = vector.broadcast %13 : vector<1x128xf32> to vector<8x128xf32>
      %c0_12 = arith.constant 0 : index
      %c0_13 = arith.constant 0 : index
      %15 = vector.load %arg7[%c0_12, %c0_13] : memref<8x128xf32, #tpu.memory_space<vmem>>, vector<8x128xf32>
      tpu.vector_store %arg7[%c0_12, %c0_13], %14 {strides = array<i32>} : memref<8x128xf32, #tpu.memory_space<vmem>>, vector<8x128xf32>,
    } else {
    }
    %c0 = arith.constant 0 : index
    %c0_1 = arith.constant 0 : index
    %3 = vector.load %arg7[%c0, %c0_1] : memref<8x128xf32, #tpu.memory_space<vmem>>, vector<8x128xf32>
    %c0_2 = arith.constant 0 : index
    %c0_3 = arith.constant 0 : index
    %4 = vector.load %arg3[%c0_2, %c0_3] : memref<8x128xf32, #tpu.memory_space<vmem>>, vector<8x128xf32>
    %c0_4 = arith.constant 0 : index
    %c0_5 = arith.constant 0 : index
    %5 = vector.load %arg4[%c0_4, %c0_5] : memref<128x128xf32, #tpu.memory_space<vmem>>, vector<128x128xf32>
    %cst = arith.constant dense<0.000000e+00> : vector<8x128xf32>
    %6 = tpu.matmul %4, %5, %cst {dimension_numbers = #tpu.dot_dimension_numbers<[1], [0], [0], [1], [0, 0, 1, 1], [], []>} : vector<8x128xf32>, vector<128x128xf32>, vector<8x128xf32> -> vector<8x128xf32>
    %7 = arith.addf %3, %6 : vector<8x128xf32>
    %c0_6 = arith.constant 0 : index
    %c0_7 = arith.constant 0 : index
    %8 = vector.load %arg7[%c0_6, %c0_7] : memref<8x128xf32, #tpu.memory_space<vmem>>, vector<8x128xf32>
    tpu.vector_store %arg7[%c0_6, %c0_7], %7 {strides = array<i32>} : memref<8x128xf32, #tpu.memory_space<vmem>>, vector<8x128xf32>,
    %c0_i32_8 = arith.constant 0 : i32
    %9 = arith.cmpi eq, %arg2, %c0_i32_8 : i32
    %10 = arith.extui %9 : i1 to i32
    %c0_i32_9 = arith.constant 0 : i32
    %11 = arith.cmpi ne, %10, %c0_i32_9 : i32
    scf.if %11 {
      %c0_10 = arith.constant 0 : index
      %c0_11 = arith.constant 0 : index
      %12 = vector.load %arg7[%c0_10, %c0_11] : memref<8x128xf32, #tpu.memory_space<vmem>>, vector<8x128xf32>
      %cst_12 = arith.constant 2.000000e-01 : f32
      %13 = vector.broadcast %cst_12 : f32 to vector<8x128xf32>
      %14 = arith.mulf %13, %12 : vector<8x128xf32>
      %15 = arith.maximumf %12, %14 : vector<8x128xf32>
      %c0_13 = arith.constant 0 : index
      %c0_14 = arith.constant 0 : index
      %16 = vector.load %arg6[%c0_13, %c0_14] : memref<8x128xf32, #tpu.memory_space<vmem>>, vector<8x128xf32>
      tpu.vector_store %arg6[%c0_13, %c0_14], %15 {strides = array<i32>} : memref<8x128xf32, #tpu.memory_space<vmem>>, vector<8x128xf32>,
    } else {
    }
    return
  }
  func.func @transform_0(%arg0: i32, %arg1: i32, %arg2: i32) -> (i32, i32) {
    %c0_i32 = arith.constant 0 : i32
    return %arg0, %arg2 : i32, i32
  }
  func.func @transform_1(%arg0: i32, %arg1: i32, %arg2: i32) -> (i32, i32) {
    %c0_i32 = arith.constant 0 : i32
    return %arg2, %arg1 : i32, i32
  }
  func.func @transform_2(%arg0: i32, %arg1: i32, %arg2: i32) -> (i32, i32) {
    %c0_i32 = arith.constant 0 : i32
    %c0_i32_0 = arith.constant 0 : i32
    return %c0_i32, %arg1 : i32, i32
  }
  func.func @transform_3(%arg0: i32, %arg1: i32, %arg2: i32) -> (i32, i32) {
    %c0_i32 = arith.constant 0 : i32
    return %arg0, %arg1 : i32, i32
  }
}

</mosaic_0001>

<llo_original>
// kernel: tpu_custom_call.1
$region0: #{tpu_custom_call.1}
  #allocation0 [shape = 'u32[]', space=smem, size = 0x4, offset = 0x4, fixed_abs, tag = 'smem constant byte address 0x4 - core index']
  #allocation1 [shape = 'u32[144,128]{1,0:T(1,128)}', space=vmem, size = 0x12000, scoped, tag = 'internal scratch']
  #allocation2 [shape = 'f32[8,128]{1,0:T(8,128)}', space=vmem, size = 0x1000, scoped, tag = 'scratch operand']
  %s0 = inlined_call_operand.hbm [shape: f32[8,128], index: 0, kind: input, shape index: {}]
  %s1 = inlined_call_operand.hbm [shape: f32[128,128], index: 1, kind: input, shape index: {}]
  %s2 = inlined_call_operand.vmem [shape: f32[1,128], index: 2, kind: input, shape index: {}]
  %s3 = inlined_call_operand.hbm [shape: f32[8,128], index: 3, kind: output, shape index: {}]
  %s4 = sld [smem:[#allocation0]]
  $region38: #{tpu_custom_call.1} parent=0
    _
  %s6 = ssub.s32 1, %s4
  %s7 = scalar_select 0, %s6, %s4
  $region1: #{tpu_custom_call.1} parent=0
    #allocation3 [shape = 'u8[4096]{0}', space=vmem, size = 0x1000, scoped, tag = 'input window, operand 0, single buffered']
    #allocation4 [shape = 's32[1]{0}', space=sflag, size = 0x4, scoped, tag = 'scoped memory for tpu_custom_call.1']
    #allocation5 [shape = 's32[1]{0}', space=sflag, size = 0x4, scoped, tag = 'scoped memory for tpu_custom_call.1']
    #allocation6 [shape = 'u8[65536]{0}', space=vmem, size = 0x10000, scoped, tag = 'input window, operand 1, single buffered']
    #allocation7 [shape = 's32[1]{0}', space=sflag, size = 0x4, scoped, tag = 'scoped memory for tpu_custom_call.1']
    #allocation8 [shape = 'u8[4096]{0}', space=vmem, size = 0x1000, scoped, tag = 'output window, operand 0, single buffered']
    %8 = vsyncpa [#allocation4], 0
    %9 = vsyncpa [#allocation7], 0
    %10 = vsyncpa [#allocation5], 0
    // Predicated region
    $region2: #{tpu_custom_call.1} parent=1 // pred_check
      _
    $region3: #{tpu_custom_call.1} parent=1 // pred_check_branch
      %12 = sbr.rel (0) target = $region5
    $region4: #{tpu_custom_call.1} parent=1 // pred_region
      %s14 = ssub.s32 128, 128
      %15 = vsyncadd [#allocation4], %s14
      %s17 = sshll.u32 [#allocation3], 4
      %s18 = int_to_ptr.vmem [resolvable:$true] %s17
      %20 = dma.hbm_to_vmem [thread:$0]  %s0, 128, %s18, [#allocation4]
    $region5: #{tpu_custom_call.1} parent=1 // pred_fallthru
      _
    // Predicated region
    $region6: #{tpu_custom_call.1} parent=1 // pred_check
      _
    $region7: #{tpu_custom_call.1} parent=1 // pred_check_branch
      %22 = sbr.rel (0) target = $region9
    $region8: #{tpu_custom_call.1} parent=1 // pred_region
      %s24 = ssub.s32 2048, 2048
      %25 = vsyncadd [#allocation7], %s24
      %s26 = sshll.u32 [#allocation6], 4
      %s27 = int_to_ptr.vmem [resolvable:$true] %s26
      %32 = dma.hbm_to_vmem [thread:$0]  %s1, 2048, %s27, [#allocation7], 128, 128, 8
    $region9: #{tpu_custom_call.1} parent=1 // pred_fallthru
      _
    // Predicated region
    $region10: #{tpu_custom_call.1} parent=1 // pred_check
      _
    $region11: #{tpu_custom_call.1} parent=1 // pred_check_branch
      %34 = sbr.rel (0) target = $region13
    $region12: #{tpu_custom_call.1} parent=1 // pred_region
      _
    $region13: #{tpu_custom_call.1} parent=1 // pred_fallthru
      _
    // Predicated region
    $region14: #{tpu_custom_call.1} parent=1 // pred_check
      _
    $region15: #{tpu_custom_call.1} parent=1 // pred_check_branch
      %36 = sbr.rel (0) target = $region17
    $region16: #{tpu_custom_call.1} parent=1 // pred_region
      %37 = dma.done [#allocation4], 128
    $region17: #{tpu_custom_call.1} parent=1 // pred_fallthru
      _
    // Predicated region
    $region18: #{tpu_custom_call.1} parent=1 // pred_check
      _
    $region19: #{tpu_custom_call.1} parent=1 // pred_check_branch
      %39 = sbr.rel (0) target = $region21
    $region20: #{tpu_custom_call.1} parent=1 // pred_region
      %40 = dma.done [#allocation7], 2048
    $region21: #{tpu_custom_call.1} parent=1 // pred_fallthru
      _
    %p41 = scmp.eq.s32.totalorder 0, 0
    // Predicated region
    $region22: #{tpu_custom_call.1} parent=1 // pred_check
      %p42 = pneg %p41
    $region23: #{tpu_custom_call.1} parent=1 // pred_check_branch
      %44 = sbr.rel (%p42) target = $region25
    $region24: #{tpu_custom_call.1} parent=1 // pred_region
      %v45 = vld [vmem:[%s2] sm:$0x1]
      %v47 = vlaneseq
      %v48 = vshrl.u32 %v47, 7
      %v49 = vsub.s32 0, %v48
      %v50 = vrot.slane %v45, %v49
      %52 = vst [vmem:[#allocation2] sm:$0xff] %v50
    $region25: #{tpu_custom_call.1} parent=1 // pred_fallthru
      _
    %v53 = vld [vmem:[#allocation2] sm:$0xff]
    %v54 = vld [vmem:[#allocation3] sm:$0xff]
    %v55 = vld [vmem:[#allocation6] sm:$0xff]
    %v56 = vld [vmem:[#allocation6 + $0x8] sm:$0xff]
    %v57 = vld [vmem:[#allocation6 + $0x10] sm:$0xff]
    %v58 = vld [vmem:[#allocation6 + $0x18] sm:$0xff]
    %v59 = vld [vmem:[#allocation6 + $0x20] sm:$0xff]
    %v60 = vld [vmem:[#allocation6 + $0x28] sm:$0xff]
    %v61 = vld [vmem:[#allocation6 + $0x30] sm:$0xff]
    %v62 = vld [vmem:[#allocation6 + $0x38] sm:$0xff]
    %v63 = vld [vmem:[#allocation6 + $0x40] sm:$0xff]
    %v64 = vld [vmem:[#allocation6 + $0x48] sm:$0xff]
    %v65 = vld [vmem:[#allocation6 + $0x50] sm:$0xff]
    %v66 = vld [vmem:[#allocation6 + $0x58] sm:$0xff]
    %v67 = vld [vmem:[#allocation6 + $0x60] sm:$0xff]
    %v68 = vld [vmem:[#allocation6 + $0x68] sm:$0xff]
    %v69 = vld [vmem:[#allocation6 + $0x70] sm:$0xff]
    %v70 = vld [vmem:[#allocation6 + $0x78] sm:$0xff]
    %71 = vmatprep.subr.mxu0 0.0
    %72 = vmatpush1.msra.mxu0 %v70
    %73 = vmatprep.subr.mxu0 0.0
    %74 = vmatpush1.msra.mxu0 %v69
    %75 = vmatprep.subr.mxu0 0.0
    %76 = vmatpush1.msra.mxu0 %v68
    %77 = vmatprep.subr.mxu0 0.0
    %78 = vmatpush1.msra.mxu0 %v67
    %79 = vmatprep.subr.mxu0 0.0
    %80 = vmatpush1.msra.mxu0 %v66
    %81 = vmatprep.subr.mxu0 0.0
    %82 = vmatpush1.msra.mxu0 %v65
    %83 = vmatprep.subr.mxu0 0.0
    %84 = vmatpush1.msra.mxu0 %v64
    %85 = vmatprep.subr.mxu0 0.0
    %86 = vmatpush1.msra.mxu0 %v63
    %87 = vmatprep.subr.mxu0 0.0
    %88 = vmatpush1.msra.mxu0 %v62
    %89 = vmatprep.subr.mxu0 0.0
    %90 = vmatpush1.msra.mxu0 %v61
    %91 = vmatprep.subr.mxu0 0.0
    %92 = vmatpush1.msra.mxu0 %v60
    %93 = vmatprep.subr.mxu0 0.0
    %94 = vmatpush1.msra.mxu0 %v59
    %95 = vmatprep.subr.mxu0 0.0
    %96 = vmatpush1.msra.mxu0 %v58
    %97 = vmatprep.subr.mxu0 0.0
    %98 = vmatpush1.msra.mxu0 %v57
    %99 = vmatprep.subr.mxu0 0.0
    %100 = vmatpush1.msra.mxu0 %v56
    %101 = vmatprep.subr.mxu0 0.0
    %102 = vmatpush1.msra.mxu0 %v55
    %103 = vmatprep.subr.mxu0 0.0
    %104 = vmatpush2.msra.mxu0 0.0
    %105 = vmatprep.subr.mxu0 0.0
    %106 = vmatpush2.msra.mxu0 0.0
    %107 = vmatprep.subr.mxu0 0.0
    %108 = vmatpush2.msra.mxu0 0.0
    %109 = vmatprep.subr.mxu0 0.0
    %110 = vmatpush2.msra.mxu0 0.0
    %111 = vmatprep.subr.mxu0 0.0
    %112 = vmatpush2.msra.mxu0 0.0
    %113 = vmatprep.subr.mxu0 0.0
    %114 = vmatpush2.msra.mxu0 0.0
    %115 = vmatprep.subr.mxu0 0.0
    %116 = vmatpush2.msra.mxu0 0.0
    %117 = vmatprep.subr.mxu0 0.0
    %118 = vmatpush2.msra.mxu0 0.0
    %119 = vmatprep.subr.mxu0 0.0
    %120 = vmatpush2.msra.mxu0 0.0
    %121 = vmatprep.subr.mxu0 0.0
    %122 = vmatpush2.msra.mxu0 0.0
    %123 = vmatprep.subr.mxu0 0.0
    %124 = vmatpush2.msra.mxu0 0.0
    %125 = vmatprep.subr.mxu0 0.0
    %126 = vmatpush2.msra.mxu0 0.0
    %127 = vmatprep.subr.mxu0 0.0
    %128 = vmatpush2.msra.mxu0 0.0
    %129 = vmatprep.subr.mxu0 0.0
    %130 = vmatpush2.msra.mxu0 0.0
    %131 = vmatprep.subr.mxu0 0.0
    %132 = vmatpush2.msra.mxu0 0.0
    %133 = vmatprep.subr.mxu0 0.0
    %134 = vmatpush2.msra.mxu0 0.0
    %135 = vmatprep.mubr.f32.mxu0 0.0
    %136 = vmatmul.mubr.f32.gmra.mxu0 %v54
    %v137 = vpop.f32.mrf.mxu0
    %v138 = vadd.f32 0.0, %v137
    %v139 = vpop.f32.mrf.mxu0
    %140 = vdwg.mxu0
    %v141 = vadd.f32 %v53, %v138
    %142 = vst [vmem:[#allocation2] sm:$0xff] %v141
    // Predicated region
    $region26: #{tpu_custom_call.1} parent=1 // pred_check
      %p143 = pneg %p41
    $region27: #{tpu_custom_call.1} parent=1 // pred_check_branch
      %145 = sbr.rel (%p143) target = $region29
    $region28: #{tpu_custom_call.1} parent=1 // pred_region
      %v146 = vld [vmem:[#allocation2] sm:$0xff]
      %v147 = vmul.f32 %v146, 0.2
      %v148 = vmax.f32 %v146, %v147
      %149 = vst [vmem:[#allocation8] sm:$0xff] %v148
    $region29: #{tpu_custom_call.1} parent=1 // pred_fallthru
      _
    // Predicated region
    $region30: #{tpu_custom_call.1} parent=1 // pred_check
      _
    $region31: #{tpu_custom_call.1} parent=1 // pred_check_branch
      %151 = sbr.rel (0) target = $region33
    $region32: #{tpu_custom_call.1} parent=1 // pred_region
      %s153 = ssub.s32 128, 128
      %154 = vsyncadd [#allocation5], %s153
      %s156 = sshll.u32 [#allocation8], 4
      %s157 = int_to_ptr.vmem [resolvable:$true] %s156
      %159 = dma.vmem_to_hbm [thread:$0]  %s157, 128, %s3, [#allocation5]
    $region33: #{tpu_custom_call.1} parent=1 // pred_fallthru
      _
    // Predicated region
    $region34: #{tpu_custom_call.1} parent=1 // pred_check
      _
    $region35: #{tpu_custom_call.1} parent=1 // pred_check_branch
      %161 = sbr.rel (0) target = $region37
    $region36: #{tpu_custom_call.1} parent=1 // pred_region
      %162 = dma.done [#allocation5], 128
    $region37: #{tpu_custom_call.1} parent=1 // pred_fallthru
      _
    %163 = vsyncpa [#allocation4], 1
    %164 = vsyncpa [#allocation7], 1
    %165 = vsyncpa [#allocation5], 1

</llo_original>
